<compile_context>
chip_gen: v7x
topology: tpu7x:2x2x1
jax: 0.10.0
libtpu: 0.0.40
codegen_flags: <defaults>
</compile_context>

<pallas_src>
import jax
import jax.numpy as jnp
from jax import lax
from jax.experimental import pallas as pl
from jax.experimental.pallas import tpu as pltpu


def _vmem_capacity_bytes():
    """Physical VMEM on this chip; conservative fallback = v7x (64 MiB)."""
    try:
        return int(pltpu.get_tpu_info().vmem_capacity_bytes)
    except Exception:
        return 64 * 1024 * 1024


def _choose_l_tile(L, c_eff, itemsize, budget_bytes):
    """Budget-driven L tile (multiple of 128); no divisibility requirement.

    Works in 128-lane chunks: picks how many tiles are needed to keep one
    block under the VMEM budget, then balances chunks across tiles so the
    last (masked) tile is not pathologically small.
    """
    total_chunks = (L + 127) // 128
    max_chunks = max(1, budget_bytes // max(1, c_eff * itemsize) // 128)
    n_tiles = -(-total_chunks // max_chunks)            # cdiv
    chunks_per_tile = -(-total_chunks // n_tiles)       # cdiv (balanced)
    return chunks_per_tile * 128


def _make_stats_kernel(tile_l, n_valid, needs_mask):
    """Lane-dense stats accumulator: s1/s2 blocks are (TN, C, 128) partials."""
    n_chunks = tile_l // 128

    def kernel(x_ref, s1_ref, s2_ref):
        @pl.when(pl.program_id(1) == 0)
        def _():
            s1_ref[...] = jnp.zeros_like(s1_ref)
            s2_ref[...] = jnp.zeros_like(s2_ref)

        base = pl.program_id(1) * tile_l

        def body(k, carry):
            start = pl.multiple_of(k * 128, 128)
            chunk = x_ref[:, :, pl.ds(start, 128)].astype(jnp.float32)
            if needs_mask:
                # Zero out lanes past the true L extent (ragged last tile /
                # tile larger than L).  Cheap VPU work, hidden under HBM BW.
                lane = lax.broadcasted_iota(jnp.int32, chunk.shape, 2)
                chunk = jnp.where(base + start + lane < n_valid, chunk, 0.0)
            s1_ref[...] += chunk
            s2_ref[...] += chunk * chunk
            return carry

        lax.fori_loop(0, n_chunks, body, 0, unroll=bool(n_chunks <= 8))

    return kernel


def _normalize_kernel(x_ref, scale_ref, shift_ref, o_ref):
    """o = x * scale + shift; per-(N,C) scale/shift broadcast over lanes."""
    x = x_ref[...].astype(jnp.float32)                       # (TN, C, TL)
    o_ref[...] = (x * scale_ref[...] + shift_ref[...]).astype(o_ref.dtype)


def switch_norm_2d(x, weight, bias, mean_weight, var_weight, eps=1e-5):
    """SwitchNorm2d forward (training mode, using_bn=True).

    x:            (N, C, H, W)
    weight, bias: (1, C, 1, 1)   affine parameters
    mean_weight:  (3,)           switching logits for means
    var_weight:   (3,)           switching logits for variances
    """
    N, C, H, W = x.shape
    L = H * W
    x3 = x.reshape(N, C, L)                     # native dtype, no f32 copy

    itemsize = x3.dtype.itemsize
    c_eff = ((C + 7) // 8) * 8                  # sublane-padded C for budgeting

    vmem_cap = _vmem_capacity_bytes()
    # ~1/16 of physical VMEM per block: 8 MiB on 128 MiB parts (v5e/v6e),
    # 4 MiB on v7x (64 MiB) -> phase-2's 4 in-flight buffers stay well under
    # the limit on every generation.
    block_budget = max(1 << 20, min(8 << 20, vmem_cap // 16))
    vmem_limit = int(vmem_cap * 3 // 4)         # above v5e's 16 MiB scoped default

    tl = _choose_l_tile(L, c_eff, itemsize, block_budget)
    grid_l = -(-L // tl)                        # cdiv: ragged last tile allowed

    # Small feature maps: block several batch rows per tile to keep blocks big.
    tn = 1
    if grid_l == 1:
        per_n = max(1, c_eff * tl * itemsize)
        tn = int(max(1, min(N, block_budget // per_n)))
    grid_n = -(-N // tn)
    grid = (grid_n, grid_l)

    needs_mask = (grid_l * tl != L)

    # ---- Phase 1: lane-dense per-(N, C) partial sums ------------------------
    stats_kernel = _make_stats_kernel(tl, L, needs_mask)
    s1p, s2p = pl.pallas_call(
        stats_kernel,
        out_shape=(jax.ShapeDtypeStruct((N, C, 128), jnp.float32),
                   jax.ShapeDtypeStruct((N, C, 128), jnp.float32)),
        grid_spec=pltpu.PrefetchScalarGridSpec(
            num_scalar_prefetch=0,
            grid=grid,
            in_specs=[pl.BlockSpec((tn, C, tl), lambda n, l: (n, 0, l))],
            out_specs=[pl.BlockSpec((tn, C, 128), lambda n, l: (n, 0, 0)),
                       pl.BlockSpec((tn, C, 128), lambda n, l: (n, 0, 0))]),
        compiler_params=pltpu.CompilerParams(
            dimension_semantics=("parallel", "arbitrary"),
            vmem_limit_bytes=vmem_limit),
    )(x3)
    # TODO(synk): on v7x, add a second 'parallel' grid axis splitting the L
    # reduction so both TensorCores are busy when N is small (batch 1).

    # ---- Tiny-stats mixing in plain JAX (a few KB of work) ------------------
    s1 = jnp.sum(s1p, axis=-1, keepdims=True)                  # (N, C, 1)
    s2 = jnp.sum(s2p, axis=-1, keepdims=True)
    Lf = jnp.float32(L)
    mean_in = s1 / Lf
    # torch.Tensor.var defaults to unbiased (correction = 1).
    # TODO(synk): single-pass variance can lose precision for very large,
    # far-from-zero-mean maps; a per-tile mean offset would fix it if needed.
    var_in = (s2 - s1 * s1 / Lf) / (Lf - 1.0)
    temp = var_in + mean_in * mean_in

    mean_ln = jnp.mean(mean_in, axis=1, keepdims=True)         # (N, 1, 1)
    var_ln = jnp.mean(temp, axis=1, keepdims=True) - mean_ln * mean_ln
    mean_bn = jnp.mean(mean_in, axis=0, keepdims=True)         # (1, C, 1)
    var_bn = jnp.mean(temp, axis=0, keepdims=True) - mean_bn * mean_bn
    # TODO(synk): running_mean / running_var moving-average update is a
    # training-time buffer side effect and is not materialized here.

    mw = jax.nn.softmax(mean_weight.astype(jnp.float32))
    vw = jax.nn.softmax(var_weight.astype(jnp.float32))
    mean = mw[0] * mean_in + mw[1] * mean_ln + mw[2] * mean_bn  # (N, C, 1)
    var = vw[0] * var_in + vw[1] * var_ln + vw[2] * var_bn      # (N, C, 1)

    gamma = weight.reshape(1, C, 1).astype(jnp.float32)
    beta = bias.reshape(1, C, 1).astype(jnp.float32)
    inv_std = lax.rsqrt(var + jnp.float32(eps))
    scale = gamma * inv_std                                     # (N, C, 1)
    shift = beta - mean * scale                                 # (N, C, 1)

    # ---- Phase 2: fused normalize + affine at true shape (no pad / slice) ---
    out = pl.pallas_call(
        _normalize_kernel,
        out_shape=jax.ShapeDtypeStruct((N, C, L), x.dtype),
        grid_spec=pltpu.PrefetchScalarGridSpec(
            num_scalar_prefetch=0,
            grid=grid,
            in_specs=[pl.BlockSpec((tn, C, tl), lambda n, l: (n, 0, l)),
                      pl.BlockSpec((tn, C, 1), lambda n, l: (n, 0, 0)),
                      pl.BlockSpec((tn, C, 1), lambda n, l: (n, 0, 0))],
            out_specs=pl.BlockSpec((tn, C, tl), lambda n, l: (n, 0, l))),
        compiler_params=pltpu.CompilerParams(
            dimension_semantics=("parallel", "parallel"),
            vmem_limit_bytes=vmem_limit),
    )(x3, scale, shift)
    # TODO(synk): for tiny spatial maps (L = 49, 196, ...) a channels-last
    # (N, H*W, C) lane-dense layout would avoid the 128-lane padding waste.

    return out.reshape(N, C, H, W)


def _reference_forward(x, weight, bias, mean_weight, var_weight, eps=1e-5):
    """Pure-JAX port of the PyTorch forward (training mode) for verification."""
    N, C, H, W = x.shape
    xv = x.reshape(N, C, -1)
    mean_in = xv.mean(-1, keepdims=True)
    var_in = xv.var(-1, keepdims=True, ddof=1)
    mean_ln = mean_in.mean(1, keepdims=True)
    temp = var_in + mean_in ** 2
    var_ln = temp.mean(1, keepdims=True) - mean_ln ** 2
    mean_bn = mean_in.mean(0, keepdims=True)
    var_bn = temp.mean(0, keepdims=True) - mean_bn ** 2
    mw = jax.nn.softmax(mean_weight)
    vw = jax.nn.softmax(var_weight)
    mean = mw[0] * mean_in + mw[1] * mean_ln + mw[2] * mean_bn
    var = vw[0] * var_in + vw[1] * var_ln + vw[2] * var_bn
    xn = (xv - mean) / jnp.sqrt(var + eps)
    xn = xn.reshape(N, C, H, W)
    return xn * weight + bias


if __name__ == "__main__":
    key = jax.random.PRNGKey(0)
    N, C, H, W = 2, 4, 16, 16

    x = jax.random.normal(key, (N, C, H, W), dtype=jnp.float32)

    # Deterministic parameter init, matching SwitchNorm2d.reset_parameters
    weight = jnp.ones((1, C, 1, 1), dtype=jnp.float32)        # last_gamma=False
    bias = jnp.zeros((1, C, 1, 1), dtype=jnp.float32)
    mean_weight = jnp.ones((3,), dtype=jnp.float32)           # using_bn=True
    var_weight = jnp.ones((3,), dtype=jnp.float32)

    out = switch_norm_2d(x, weight, bias, mean_weight, var_weight)
    out = jax.block_until_ready(out)

    ref = _reference_forward(x, weight, bias, mean_weight, var_weight)
    ref = jax.block_until_ready(ref)

    assert out.shape == (N, C, H, W)
    assert out.dtype == x.dtype
    assert jnp.allclose(out, ref, atol=1e-4, rtol=1e-4)

    print("KERNEL_OK")
</pallas_src>

<mosaic_0001>
module attributes {stable_mosaic.version = 11 : i64} {
  func.func @kernel(%arg0: i32, %arg1: i32, %arg2: memref<2x4x256xf32, #tpu.memory_space<vmem>>, %arg3: memref<2x4x128xf32, #tpu.memory_space<vmem>>, %arg4: memref<2x4x128xf32, #tpu.memory_space<vmem>>) attributes {dimension_semantics = [#tpu.dimension_semantics<parallel>, #tpu.dimension_semantics<arbitrary>], iteration_bounds = array<i64: 1, 1>, scalar_prefetch = 0 : i64, scratch_operands = 0 : i64, tpu.core_type = #tpu.core_type<tc>, window_params = [{transform_indices = @transform_0, window_bounds = array<i64: 2, 4, 256>}, {transform_indices = @transform_1, window_bounds = array<i64: 2, 4, 128>}, {transform_indices = @transform_2, window_bounds = array<i64: 2, 4, 128>}]} {
    %c0_i32 = arith.constant 0 : i32
    %0 = arith.cmpi eq, %arg1, %c0_i32 : i32
    %1 = arith.extui %0 : i1 to i32
    %c0_i32_0 = arith.constant 0 : i32
    %2 = arith.cmpi ne, %1, %c0_i32_0 : i32
    scf.if %2 {
      %cst = arith.constant 0.000000e+00 : f32
      %25 = vector.broadcast %cst : f32 to vector<2x4x128xf32>
      %c0_30 = arith.constant 0 : index
      %c0_31 = arith.constant 0 : index
      %c0_32 = arith.constant 0 : index
      %26 = vector.load %arg3[%c0_30, %c0_31, %c0_32] : memref<2x4x128xf32, #tpu.memory_space<vmem>>, vector<2x4x128xf32>
      tpu.vector_store %arg3[%c0_30, %c0_31, %c0_32], %25 {strides = array<i32>} : memref<2x4x128xf32, #tpu.memory_space<vmem>>, vector<2x4x128xf32>,
      %cst_33 = arith.constant 0.000000e+00 : f32
      %27 = vector.broadcast %cst_33 : f32 to vector<2x4x128xf32>
      %c0_34 = arith.constant 0 : index
      %c0_35 = arith.constant 0 : index
      %c0_36 = arith.constant 0 : index
      %28 = vector.load %arg4[%c0_34, %c0_35, %c0_36] : memref<2x4x128xf32, #tpu.memory_space<vmem>>, vector<2x4x128xf32>
      tpu.vector_store %arg4[%c0_34, %c0_35, %c0_36], %27 {strides = array<i32>} : memref<2x4x128xf32, #tpu.memory_space<vmem>>, vector<2x4x128xf32>,
    } else {
    }
    %c0_i32_1 = arith.constant 0 : i32
    %c128_i32 = arith.constant 128 : i32
    %3 = arith.muli %c0_i32_1, %c128_i32 : i32
    %4 = tpu.assume_multiple %3, 128 : i32
    %c0 = arith.constant 0 : index
    %c0_2 = arith.constant 0 : index
    %5 = arith.index_cast %4 : i32 to index
    %6 = vector.load %arg2[%c0, %c0_2, %5] : memref<2x4x256xf32, #tpu.memory_space<vmem>>, vector<2x4x128xf32>
    %c0_3 = arith.constant 0 : index
    %c0_4 = arith.constant 0 : index
    %c0_5 = arith.constant 0 : index
    %7 = vector.load %arg3[%c0_3, %c0_4, %c0_5] : memref<2x4x128xf32, #tpu.memory_space<vmem>>, vector<2x4x128xf32>
    %8 = arith.addf %7, %6 : vector<2x4x128xf32>
    %c0_6 = arith.constant 0 : index
    %c0_7 = arith.constant 0 : index
    %c0_8 = arith.constant 0 : index
    %9 = vector.load %arg3[%c0_6, %c0_7, %c0_8] : memref<2x4x128xf32, #tpu.memory_space<vmem>>, vector<2x4x128xf32>
    tpu.vector_store %arg3[%c0_6, %c0_7, %c0_8], %8 {strides = array<i32>} : memref<2x4x128xf32, #tpu.memory_space<vmem>>, vector<2x4x128xf32>,
    %c0_9 = arith.constant 0 : index
    %c0_10 = arith.constant 0 : index
    %c0_11 = arith.constant 0 : index
    %10 = vector.load %arg4[%c0_9, %c0_10, %c0_11] : memref<2x4x128xf32, #tpu.memory_space<vmem>>, vector<2x4x128xf32>
    %11 = arith.mulf %6, %6 : vector<2x4x128xf32>
    %12 = arith.addf %10, %11 : vector<2x4x128xf32>
    %c0_12 = arith.constant 0 : index
    %c0_13 = arith.constant 0 : index
    %c0_14 = arith.constant 0 : index
    %13 = vector.load %arg4[%c0_12, %c0_13, %c0_14] : memref<2x4x128xf32, #tpu.memory_space<vmem>>, vector<2x4x128xf32>
    tpu.vector_store %arg4[%c0_12, %c0_13, %c0_14], %12 {strides = array<i32>} : memref<2x4x128xf32, #tpu.memory_space<vmem>>, vector<2x4x128xf32>,
    %c1_i32 = arith.constant 1 : i32
    %c128_i32_15 = arith.constant 128 : i32
    %14 = arith.muli %c1_i32, %c128_i32_15 : i32
    %15 = tpu.assume_multiple %14, 128 : i32
    %c0_16 = arith.constant 0 : index
    %c0_17 = arith.constant 0 : index
    %16 = arith.index_cast %15 : i32 to index
    %17 = vector.load %arg2[%c0_16, %c0_17, %16] : memref<2x4x256xf32, #tpu.memory_space<vmem>>, vector<2x4x128xf32>
    %c0_18 = arith.constant 0 : index
    %c0_19 = arith.constant 0 : index
    %c0_20 = arith.constant 0 : index
    %18 = vector.load %arg3[%c0_18, %c0_19, %c0_20] : memref<2x4x128xf32, #tpu.memory_space<vmem>>, vector<2x4x128xf32>
    %19 = arith.addf %18, %17 : vector<2x4x128xf32>
    %c0_21 = arith.constant 0 : index
    %c0_22 = arith.constant 0 : index
    %c0_23 = arith.constant 0 : index
    %20 = vector.load %arg3[%c0_21, %c0_22, %c0_23] : memref<2x4x128xf32, #tpu.memory_space<vmem>>, vector<2x4x128xf32>
    tpu.vector_store %arg3[%c0_21, %c0_22, %c0_23], %19 {strides = array<i32>} : memref<2x4x128xf32, #tpu.memory_space<vmem>>, vector<2x4x128xf32>,
    %c0_24 = arith.constant 0 : index
    %c0_25 = arith.constant 0 : index
    %c0_26 = arith.constant 0 : index
    %21 = vector.load %arg4[%c0_24, %c0_25, %c0_26] : memref<2x4x128xf32, #tpu.memory_space<vmem>>, vector<2x4x128xf32>
    %22 = arith.mulf %17, %17 : vector<2x4x128xf32>
    %23 = arith.addf %21, %22 : vector<2x4x128xf32>
    %c0_27 = arith.constant 0 : index
    %c0_28 = arith.constant 0 : index
    %c0_29 = arith.constant 0 : index
    %24 = vector.load %arg4[%c0_27, %c0_28, %c0_29] : memref<2x4x128xf32, #tpu.memory_space<vmem>>, vector<2x4x128xf32>
    tpu.vector_store %arg4[%c0_27, %c0_28, %c0_29], %23 {strides = array<i32>} : memref<2x4x128xf32, #tpu.memory_space<vmem>>, vector<2x4x128xf32>,
    %c2_i32 = arith.constant 2 : i32
    return
  }
  func.func @transform_0(%arg0: i32, %arg1: i32) -> (i32, i32, i32) {
    %c0_i32 = arith.constant 0 : i32
    %c0_i32_0 = arith.constant 0 : i32
    return %arg0, %c0_i32, %arg1 : i32, i32, i32
  }
  func.func @transform_1(%arg0: i32, %arg1: i32) -> (i32, i32, i32) {
    %c0_i32 = arith.constant 0 : i32
    %c0_i32_0 = arith.constant 0 : i32
    %c0_i32_1 = arith.constant 0 : i32
    return %arg0, %c0_i32, %c0_i32_0 : i32, i32, i32
  }
  func.func @transform_2(%arg0: i32, %arg1: i32) -> (i32, i32, i32) {
    %c0_i32 = arith.constant 0 : i32
    %c0_i32_0 = arith.constant 0 : i32
    %c0_i32_1 = arith.constant 0 : i32
    return %arg0, %c0_i32, %c0_i32_0 : i32, i32, i32
  }
}

</mosaic_0001>

<llo_original>
// kernel: tpu_custom_call.1
$region0: #{tpu_custom_call.1}
  #allocation0 [shape = 'u32[]', space=smem, size = 0x4, offset = 0x4, fixed_abs, tag = 'smem constant byte address 0x4 - core index']
  #allocation1 [shape = 'u32[144,128]{1,0:T(1,128)}', space=vmem, size = 0x12000, scoped, tag = 'internal scratch']
  %s0 = inlined_call_operand.hbm [shape: f32[2,4,256], index: 0, kind: input, shape index: {}]
  %s1 = inlined_call_operand.hbm [shape: f32[2,4,128], index: 1, kind: output, shape index: {0}]
  %s2 = inlined_call_operand.hbm [shape: f32[2,4,128], index: 2, kind: output, shape index: {1}]
  %3 = xla_tuple %s1, %s2
  %s4 = sld [smem:[#allocation0]]
  $region30: #{tpu_custom_call.1} parent=0
    _
  %s6 = ssub.s32 1, %s4
  %s7 = scalar_select 0, %s6, %s4
  $region1: #{tpu_custom_call.1} parent=0
    #allocation2 [shape = 'u8[8192]{0}', space=vmem, size = 0x2000, scoped, tag = 'input window, operand 0, single buffered']
    #allocation3 [shape = 's32[1]{0}', space=sflag, size = 0x4, scoped, tag = 'scoped memory for tpu_custom_call.1']
    #allocation4 [shape = 's32[1]{0}', space=sflag, size = 0x4, scoped, tag = 'scoped memory for tpu_custom_call.1']
    #allocation5 [shape = 'u8[4096]{0}', space=vmem, size = 0x1000, scoped, tag = 'output window, operand 0, single buffered']
    #allocation6 [shape = 'u8[4096]{0}', space=vmem, size = 0x1000, scoped, tag = 'output window, operand 1, single buffered']
    #allocation7 [shape = 's32[1]{0}', space=sflag, size = 0x4, scoped, tag = 'scoped memory for tpu_custom_call.1']
    %8 = vsyncpa [#allocation3], 0
    %9 = vsyncpa [#allocation4], 0
    %10 = vsyncpa [#allocation7], 0
    // Predicated region
    $region2: #{tpu_custom_call.1} parent=1 // pred_check
      _
    $region3: #{tpu_custom_call.1} parent=1 // pred_check_branch
      %12 = sbr.rel (0) target = $region5
    $region4: #{tpu_custom_call.1} parent=1 // pred_region
      %s14 = ssub.s32 256, 256
      %15 = vsyncadd [#allocation3], %s14
      %s16 = sshll.u32 [#allocation2], 4
      %s17 = int_to_ptr.vmem [resolvable:$true] %s16
      %22 = dma.hbm_to_vmem [thread:$0]  %s0, 256, %s17, [#allocation3], 128, 128, 8
    $region5: #{tpu_custom_call.1} parent=1 // pred_fallthru
      _
    // Predicated region
    $region6: #{tpu_custom_call.1} parent=1 // pred_check
      _
    $region7: #{tpu_custom_call.1} parent=1 // pred_check_branch
      %24 = sbr.rel (0) target = $region9
    $region8: #{tpu_custom_call.1} parent=1 // pred_region
      %25 = dma.done [#allocation3], 256
    $region9: #{tpu_custom_call.1} parent=1 // pred_fallthru
      _
    %p26 = scmp.eq.s32.totalorder 0, 0
    // Predicated region
    $region10: #{tpu_custom_call.1} parent=1 // pred_check
      %p27 = pneg %p26
    $region11: #{tpu_custom_call.1} parent=1 // pred_check_branch
      %29 = sbr.rel (%p27) target = $region13
    $region12: #{tpu_custom_call.1} parent=1 // pred_region
      %30 = vst [vmem:[#allocation5] sm:$0xf] 0.0
      %31 = vst [vmem:[#allocation5 + $0x4] sm:$0xf] 0.0
      %32 = vst [vmem:[#allocation6] sm:$0xf] 0.0
      %33 = vst [vmem:[#allocation6 + $0x4] sm:$0xf] 0.0
    $region13: #{tpu_custom_call.1} parent=1 // pred_fallthru
      _
    %v34 = vld [vmem:[#allocation2] sm:$0xf]
    %v35 = vld [vmem:[#allocation2 + $0x8] sm:$0xf]
    %v36 = vld [vmem:[#allocation5] sm:$0xf]
    %v37 = vld [vmem:[#allocation5 + $0x4] sm:$0xf]
    %v38 = vadd.f32 %v36, %v34
    %v39 = vadd.f32 %v37, %v35
    %40 = vst [vmem:[#allocation5] sm:$0xf] %v38
    %41 = vst [vmem:[#allocation5 + $0x4] sm:$0xf] %v39
    %v42 = vld [vmem:[#allocation6] sm:$0xf]
    %v43 = vld [vmem:[#allocation6 + $0x4] sm:$0xf]
    %v44 = vmul.f32 %v34, %v34
    %v45 = vmul.f32 %v35, %v35
    %v46 = vadd.f32 %v42, %v44
    %v47 = vadd.f32 %v43, %v45
    %48 = vst [vmem:[#allocation6] sm:$0xf] %v46
    %49 = vst [vmem:[#allocation6 + $0x4] sm:$0xf] %v47
    %s50 = scalar_lea.vmem [#allocation2], 4
    %v51 = vld [vmem:[%s50] sm:$0xf]
    %v52 = vld [vmem:[%s50 + $0x8] sm:$0xf]
    %v53 = vld [vmem:[#allocation5] sm:$0xf]
    %v54 = vld [vmem:[#allocation5 + $0x4] sm:$0xf]
    %v55 = vadd.f32 %v53, %v51
    %v56 = vadd.f32 %v54, %v52
    %57 = vst [vmem:[#allocation5] sm:$0xf] %v55
    %58 = vst [vmem:[#allocation5 + $0x4] sm:$0xf] %v56
    %v59 = vld [vmem:[#allocation6] sm:$0xf]
    %v60 = vld [vmem:[#allocation6 + $0x4] sm:$0xf]
    %v61 = vmul.f32 %v51, %v51
    %v62 = vmul.f32 %v52, %v52
    %v63 = vadd.f32 %v59, %v61
    %v64 = vadd.f32 %v60, %v62
    %65 = vst [vmem:[#allocation6] sm:$0xf] %v63
    %66 = vst [vmem:[#allocation6 + $0x4] sm:$0xf] %v64
    // Predicated region
    $region14: #{tpu_custom_call.1} parent=1 // pred_check
      _
    $region15: #{tpu_custom_call.1} parent=1 // pred_check_branch
      %68 = sbr.rel (0) target = $region17
    $region16: #{tpu_custom_call.1} parent=1 // pred_region
      %s70 = ssub.s32 128, 128
      %71 = vsyncadd [#allocation4], %s70
      %s72 = sshll.u32 [#allocation5], 4
      %s73 = int_to_ptr.vmem [resolvable:$true] %s72
      %78 = dma.vmem_to_hbm [thread:$0]  %s73, 128, %s1, [#allocation4], 64, 64, 4
    $region17: #{tpu_custom_call.1} parent=1 // pred_fallthru
      _
    // Predicated region
    $region18: #{tpu_custom_call.1} parent=1 // pred_check
      _
    $region19: #{tpu_custom_call.1} parent=1 // pred_check_branch
      %80 = sbr.rel (0) target = $region21
    $region20: #{tpu_custom_call.1} parent=1 // pred_region
      %s82 = ssub.s32 128, 128
      %83 = vsyncadd [#allocation7], %s82
      %s84 = sshll.u32 [#allocation6], 4
      %s85 = int_to_ptr.vmem [resolvable:$true] %s84
      %90 = dma.vmem_to_hbm [thread:$0]  %s85, 128, %s2, [#allocation7], 64, 64, 4
    $region21: #{tpu_custom_call.1} parent=1 // pred_fallthru
      _
    // Predicated region
    $region22: #{tpu_custom_call.1} parent=1 // pred_check
      _
    $region23: #{tpu_custom_call.1} parent=1 // pred_check_branch
      %92 = sbr.rel (0) target = $region25
    $region24: #{tpu_custom_call.1} parent=1 // pred_region
      %93 = dma.done [#allocation4], 128
    $region25: #{tpu_custom_call.1} parent=1 // pred_fallthru
      _
    // Predicated region
    $region26: #{tpu_custom_call.1} parent=1 // pred_check
      _
    $region27: #{tpu_custom_call.1} parent=1 // pred_check_branch
      %95 = sbr.rel (0) target = $region29
    $region28: #{tpu_custom_call.1} parent=1 // pred_region
      %96 = dma.done [#allocation7], 128
    $region29: #{tpu_custom_call.1} parent=1 // pred_fallthru
      _
    %97 = vsyncpa [#allocation3], 1
    %98 = vsyncpa [#allocation4], 1
    %99 = vsyncpa [#allocation7], 1

</llo_original>
